<compile_context>
chip_gen: v5e
topology: v5e:2x2
jax: 0.10.0
libtpu: 0.0.40
codegen_flags: <defaults>
</compile_context>

<pallas_src>
import functools

import jax
import jax.numpy as jnp
from jax.experimental import pallas as pl
from jax.experimental.pallas import tpu as pltpu


def _mlp_kernel(x_ref, w1_ref, b1_ref, w2_ref, b2_ref, o_ref, acc_ref):
    # x_ref:  (tm, C_in_p)      w1_ref: (C_in_p, th)   b1_ref: (1, th)
    # w2_ref: (th, C_out_p)     b2_ref: (1, C_out_p)
    # o_ref:  (tm, C_out_p)     acc_ref: (tm, C_out_p) f32 scratch
    k = pl.program_id(1)

    @pl.when(k == 0)
    def _init():
        acc_ref[...] = jnp.zeros_like(acc_ref)

    x = x_ref[...]

    # fc1 (slice of the hidden dim) + bias, accumulate in f32
    h = jnp.dot(x, w1_ref[...], preferred_element_type=jnp.float32)
    h = h + b1_ref[...].astype(jnp.float32)

    # exact GELU (erf based) to match torch.nn.GELU() default
    h = 0.5 * h * (1.0 + jax.lax.erf(h * 0.7071067811865476))

    # fc2 partial product over this hidden slice
    acc_ref[...] += jnp.dot(h.astype(x.dtype), w2_ref[...],
                            preferred_element_type=jnp.float32)

    @pl.when(k == pl.num_programs(1) - 1)
    def _finalize():
        o_ref[...] = (acc_ref[...] + b2_ref[...].astype(jnp.float32)
                      ).astype(o_ref.dtype)


def _round_up(x, m):
    return ((x + m - 1) // m) * m


def _pick_hidden_tile(h_padded, max_tile):
    """Largest multiple of 128 that divides h_padded and is <= max_tile."""
    m = h_padded // 128
    best = 1
    for d in range(1, m + 1):
        if m % d == 0 and d * 128 <= max_tile:
            best = d
    return best * 128


@functools.partial(jax.jit, static_argnames=("block_tokens", "block_hidden"))
def mlp_pallas(x, w1, b1, w2, b2, *, block_tokens=512, block_hidden=512):
    """x: (..., C_in). w1: (C_in, H), b1: (H,), w2: (H, C_out), b2: (C_out,).

    Returns (..., C_out).  Weights are stored transposed relative to
    nn.Linear's (out, in) layout so the kernel does row-major matmuls.
    """
    orig_shape = x.shape
    C_in = orig_shape[-1]
    H = w1.shape[1]
    C_out = w2.shape[1]

    tokens = 1
    for d in orig_shape[:-1]:
        tokens *= int(d)
    x2d = x.reshape(tokens, C_in)

    # --- lane-dense feature padding (exact: padded weights/biases are zero) ---
    cin_p = _round_up(C_in, 128)
    h_p = _round_up(H, 128)
    cout_p = _round_up(C_out, 128)

    # --- token tile (multiple of 8 sublanes); ragged counts handled by pad ---
    tm = _round_up(min(block_tokens, _round_up(tokens, 8)), 8)
    tokens_p = _round_up(tokens, tm)

    # --- hidden (reduction) tile ---
    th = _pick_hidden_tile(h_p, max(block_hidden, 128))

    x2d = jnp.pad(x2d, ((0, tokens_p - tokens), (0, cin_p - C_in)))
    w1p = jnp.pad(w1, ((0, cin_p - C_in), (0, h_p - H)))
    b1p = jnp.pad(b1.reshape(1, H), ((0, 0), (0, h_p - H)))
    w2p = jnp.pad(w2, ((0, h_p - H), (0, cout_p - C_out)))
    b2p = jnp.pad(b2.reshape(1, C_out), ((0, 0), (0, cout_p - C_out)))

    grid = (tokens_p // tm, h_p // th)

    # --- explicit VMEM budget: double-buffered tiles + f32 acc/intermediate ---
    itemsize = x.dtype.itemsize
    vmem_needed = (
        2 * itemsize * (tm * cin_p + cin_p * th + th
                        + th * cout_p + cout_p + tm * cout_p)
        + 4 * (tm * cout_p + tm * th))
    vmem_limit = int(min(64 * 1024 * 1024,
                         max(32 * 1024 * 1024, 2 * vmem_needed)))

    out2d = pl.pallas_call(
        _mlp_kernel,
        out_shape=jax.ShapeDtypeStruct((tokens_p, cout_p), x.dtype),
        grid_spec=pltpu.PrefetchScalarGridSpec(
            num_scalar_prefetch=0,
            grid=grid,
            in_specs=[
                pl.BlockSpec((tm, cin_p), lambda i, k: (i, 0)),    # x tile
                pl.BlockSpec((cin_p, th), lambda i, k: (0, k)),    # w1 H-slice
                pl.BlockSpec((1, th), lambda i, k: (0, k)),        # b1 H-slice
                pl.BlockSpec((th, cout_p), lambda i, k: (k, 0)),   # w2 H-slice
                pl.BlockSpec((1, cout_p), lambda i, k: (0, 0)),    # b2 resident
            ],
            out_specs=pl.BlockSpec((tm, cout_p), lambda i, k: (i, 0)),
            scratch_shapes=[pltpu.VMEM((tm, cout_p), jnp.float32)],
        ),
        compiler_params=pltpu.CompilerParams(
            dimension_semantics=("parallel", "arbitrary"),
            vmem_limit_bytes=vmem_limit,
        ),
    )(x2d, w1p, b1p, w2p, b2p)

    out = out2d[:tokens, :C_out]
    return out.reshape(*orig_shape[:-1], C_out)


def mlp_reference(x, w1, b1, w2, b2):
    h = jnp.einsum("bnc,ch->bnh", x, w1) + b1
    h = 0.5 * h * (1.0 + jax.lax.erf(h / jnp.sqrt(2.0)))
    return jnp.einsum("bnh,ho->bno", h, w2) + b2


if __name__ == "__main__":
    # Small shapes consistent with the module:
    # batch=2, seq(tokens)=64, in_features=32, hidden_features=64, out=in.
    B, N = 2, 64
    in_features, hidden_features = 32, 64
    out_features = in_features

    key = jax.random.PRNGKey(0)
    kx, k1, k2, k3, k4 = jax.random.split(key, 5)

    x = jax.random.normal(kx, (B, N, in_features), dtype=jnp.float32)

    # Parameters stored as (in, out) (transpose of nn.Linear's (out, in)).
    w1 = jax.random.normal(k1, (in_features, hidden_features), jnp.float32) * 0.05
    b1 = jax.random.normal(k2, (hidden_features,), jnp.float32) * 0.05
    w2 = jax.random.normal(k3, (hidden_features, out_features), jnp.float32) * 0.05
    b2 = jax.random.normal(k4, (out_features,), jnp.float32) * 0.05

    out = mlp_pallas(x, w1, b1, w2, b2)
    out = jax.block_until_ready(out)

    ref = mlp_reference(x, w1, b1, w2, b2)
    assert out.shape == (B, N, out_features)
    assert jnp.allclose(out, ref, atol=1e-4, rtol=1e-4), "mismatch vs reference"

    print("KERNEL_OK")
</pallas_src>

<mosaic_0001>
module attributes {stable_mosaic.version = 11 : i64} {
  func.func @_mlp_kernel(%arg0: i32, %arg1: i32, %arg2: memref<128x128xf32, #tpu.memory_space<vmem>>, %arg3: memref<128x128xf32, #tpu.memory_space<vmem>>, %arg4: memref<1x128xf32, #tpu.memory_space<vmem>>, %arg5: memref<128x128xf32, #tpu.memory_space<vmem>>, %arg6: memref<1x128xf32, #tpu.memory_space<vmem>>, %arg7: memref<128x128xf32, #tpu.memory_space<vmem>>, %arg8: memref<128x128xf32, #tpu.memory_space<vmem>>) attributes {dimension_semantics = [#tpu.dimension_semantics<parallel>, #tpu.dimension_semantics<arbitrary>], iteration_bounds = array<i64: 1, 1>, scalar_prefetch = 0 : i64, scratch_operands = 1 : i64, tpu.core_type = #tpu.core_type<tc>, window_params = [{transform_indices = @transform_0, window_bounds = array<i64: 128, 128>}, {transform_indices = @transform_1, window_bounds = array<i64: 128, 128>}, {transform_indices = @transform_2, window_bounds = array<i64: 1, 128>}, {transform_indices = @transform_3, window_bounds = array<i64: 128, 128>}, {pipeline_mode = #tpu.pipeline_mode<synchronous>, transform_indices = @transform_4, window_bounds = array<i64: 1, 128>}, {transform_indices = @transform_5, window_bounds = array<i64: 128, 128>}]} {
    %c0_i32 = arith.constant 0 : i32
    %0 = arith.cmpi eq, %arg1, %c0_i32 : i32
    %1 = arith.extui %0 : i1 to i32
    %c0_i32_0 = arith.constant 0 : i32
    %2 = arith.cmpi ne, %1, %c0_i32_0 : i32
    scf.if %2 {
      %cst_18 = arith.constant 0.000000e+00 : f32
      %25 = vector.broadcast %cst_18 : f32 to vector<128x128xf32>
      %c0_19 = arith.constant 0 : index
      %c0_20 = arith.constant 0 : index
      %26 = vector.load %arg8[%c0_19, %c0_20] : memref<128x128xf32, #tpu.memory_space<vmem>>, vector<128x128xf32>
      tpu.vector_store %arg8[%c0_19, %c0_20], %25 {strides = array<i32>} : memref<128x128xf32, #tpu.memory_space<vmem>>, vector<128x128xf32>,
    } else {
    }
    %c0 = arith.constant 0 : index
    %c0_1 = arith.constant 0 : index
    %3 = vector.load %arg2[%c0, %c0_1] : memref<128x128xf32, #tpu.memory_space<vmem>>, vector<128x128xf32>
    %c0_2 = arith.constant 0 : index
    %c0_3 = arith.constant 0 : index
    %4 = vector.load %arg3[%c0_2, %c0_3] : memref<128x128xf32, #tpu.memory_space<vmem>>, vector<128x128xf32>
    %cst = arith.constant dense<0.000000e+00> : vector<128x128xf32>
    %5 = tpu.matmul %3, %4, %cst {dimension_numbers = #tpu.dot_dimension_numbers<[1], [0], [0], [1], [0, 0, 1, 1], [], []>} : vector<128x128xf32>, vector<128x128xf32>, vector<128x128xf32> -> vector<128x128xf32>
    %c0_4 = arith.constant 0 : index
    %c0_5 = arith.constant 0 : index
    %6 = vector.load %arg4[%c0_4, %c0_5] : memref<1x128xf32, #tpu.memory_space<vmem>>, vector<1x128xf32>
    %7 = vector.broadcast %6 : vector<1x128xf32> to vector<128x128xf32>
    %8 = arith.addf %5, %7 : vector<128x128xf32>
    %cst_6 = arith.constant 5.000000e-01 : f32
    %9 = vector.broadcast %cst_6 : f32 to vector<128x128xf32>
    %10 = arith.mulf %9, %8 : vector<128x128xf32>
    %cst_7 = arith.constant 0.707106769 : f32
    %11 = vector.broadcast %cst_7 : f32 to vector<128x128xf32>
    %12 = arith.mulf %8, %11 : vector<128x128xf32>
    %13 = math.erf %12 : vector<128x128xf32>
    %cst_8 = arith.constant 1.000000e+00 : f32
    %14 = vector.broadcast %cst_8 : f32 to vector<128x128xf32>
    %15 = arith.addf %14, %13 : vector<128x128xf32>
    %16 = arith.mulf %10, %15 : vector<128x128xf32>
    %c0_9 = arith.constant 0 : index
    %c0_10 = arith.constant 0 : index
    %17 = vector.load %arg8[%c0_9, %c0_10] : memref<128x128xf32, #tpu.memory_space<vmem>>, vector<128x128xf32>
    %c0_11 = arith.constant 0 : index
    %c0_12 = arith.constant 0 : index
    %18 = vector.load %arg5[%c0_11, %c0_12] : memref<128x128xf32, #tpu.memory_space<vmem>>, vector<128x128xf32>
    %cst_13 = arith.constant dense<0.000000e+00> : vector<128x128xf32>
    %19 = tpu.matmul %16, %18, %cst_13 {dimension_numbers = #tpu.dot_dimension_numbers<[1], [0], [0], [1], [0, 0, 1, 1], [], []>} : vector<128x128xf32>, vector<128x128xf32>, vector<128x128xf32> -> vector<128x128xf32>
    %20 = arith.addf %17, %19 : vector<128x128xf32>
    %c0_14 = arith.constant 0 : index
    %c0_15 = arith.constant 0 : index
    %21 = vector.load %arg8[%c0_14, %c0_15] : memref<128x128xf32, #tpu.memory_space<vmem>>, vector<128x128xf32>
    tpu.vector_store %arg8[%c0_14, %c0_15], %20 {strides = array<i32>} : memref<128x128xf32, #tpu.memory_space<vmem>>, vector<128x128xf32>,
    %c0_i32_16 = arith.constant 0 : i32
    %22 = arith.cmpi eq, %arg1, %c0_i32_16 : i32
    %23 = arith.extui %22 : i1 to i32
    %c0_i32_17 = arith.constant 0 : i32
    %24 = arith.cmpi ne, %23, %c0_i32_17 : i32
    scf.if %24 {
      %c0_18 = arith.constant 0 : index
      %c0_19 = arith.constant 0 : index
      %25 = vector.load %arg8[%c0_18, %c0_19] : memref<128x128xf32, #tpu.memory_space<vmem>>, vector<128x128xf32>
      %c0_20 = arith.constant 0 : index
      %c0_21 = arith.constant 0 : index
      %26 = vector.load %arg6[%c0_20, %c0_21] : memref<1x128xf32, #tpu.memory_space<vmem>>, vector<1x128xf32>
      %27 = vector.broadcast %26 : vector<1x128xf32> to vector<128x128xf32>
      %28 = arith.addf %25, %27 : vector<128x128xf32>
      %c0_22 = arith.constant 0 : index
      %c0_23 = arith.constant 0 : index
      %29 = vector.load %arg7[%c0_22, %c0_23] : memref<128x128xf32, #tpu.memory_space<vmem>>, vector<128x128xf32>
      tpu.vector_store %arg7[%c0_22, %c0_23], %28 {strides = array<i32>} : memref<128x128xf32, #tpu.memory_space<vmem>>, vector<128x128xf32>,
    } else {
    }
    return
  }
  func.func @transform_0(%arg0: i32, %arg1: i32) -> (i32, i32) {
    %c0_i32 = arith.constant 0 : i32
    %c0_i32_0 = arith.constant 0 : i32
    return %arg0, %c0_i32 : i32, i32
  }
  func.func @transform_1(%arg0: i32, %arg1: i32) -> (i32, i32) {
    %c0_i32 = arith.constant 0 : i32
    %c0_i32_0 = arith.constant 0 : i32
    return %c0_i32, %arg1 : i32, i32
  }
  func.func @transform_2(%arg0: i32, %arg1: i32) -> (i32, i32) {
    %c0_i32 = arith.constant 0 : i32
    %c0_i32_0 = arith.constant 0 : i32
    return %c0_i32, %arg1 : i32, i32
  }
  func.func @transform_3(%arg0: i32, %arg1: i32) -> (i32, i32) {
    %c0_i32 = arith.constant 0 : i32
    %c0_i32_0 = arith.constant 0 : i32
    return %arg1, %c0_i32 : i32, i32
  }
  func.func @transform_4(%arg0: i32, %arg1: i32) -> (i32, i32) {
    %c0_i32 = arith.constant 0 : i32
    %c0_i32_0 = arith.constant 0 : i32
    %c0_i32_1 = arith.constant 0 : i32
    return %c0_i32, %c0_i32_0 : i32, i32
  }
  func.func @transform_5(%arg0: i32, %arg1: i32) -> (i32, i32) {
    %c0_i32 = arith.constant 0 : i32
    %c0_i32_0 = arith.constant 0 : i32
    return %arg0, %c0_i32 : i32, i32
  }
}

</mosaic_0001>

<llo_original>
// kernel: mlp_pallas.1
$region0: #{mlp_pallas.1}
  #allocation0 [shape = 'u32[]', space=smem, size = 0x4, offset = 0x4, fixed_abs, tag = 'smem constant byte address 0x4 - core index']
  #allocation1 [shape = 'u32[72,128]{1,0:T(1,128)}', space=vmem, size = 0x9000, scoped, tag = 'internal scratch']
  #allocation2 [shape = 'f32[128,128]{1,0:T(8,128)}', space=vmem, size = 0x10000, scoped, tag = 'scratch operand']
  %s0 = inlined_call_operand.vmem [shape: f32[128,128], index: 0, kind: input, shape index: {}]
  %s1 = inlined_call_operand.vmem [shape: f32[128,128], index: 1, kind: input, shape index: {}]
  %s2 = inlined_call_operand.vmem [shape: f32[1,128], index: 2, kind: input, shape index: {}]
  %s3 = inlined_call_operand.vmem [shape: f32[128,128], index: 3, kind: input, shape index: {}]
  %s4 = inlined_call_operand.vmem [shape: f32[1,128], index: 4, kind: input, shape index: {}]
  %s5 = inlined_call_operand.vmem [shape: f32[128,128], index: 5, kind: output, shape index: {}]
  %s6 = sld [smem:[#allocation0]]
  $region38: #{mlp_pallas.1} parent=0
    _
  %s8 = ssub.s32 1, %s6
  %s9 = scalar_select 0, %s8, %s6
  // Predicated region
  $region2: #{mlp_pallas.1} parent=0 // pred_check
    _
  $region3: #{mlp_pallas.1} parent=0 // pred_check_branch
    %11 = sbr.rel (0) target = $region5
  $region4: #{mlp_pallas.1} parent=0 // pred_region
    _
  $region5: #{mlp_pallas.1} parent=0 // pred_fallthru
    _
  // Predicated region
  $region6: #{mlp_pallas.1} parent=0 // pred_check
    _
  $region7: #{mlp_pallas.1} parent=0 // pred_check_branch
    %13 = sbr.rel (0) target = $region9
  $region8: #{mlp_pallas.1} parent=0 // pred_region
    _
  $region9: #{mlp_pallas.1} parent=0 // pred_fallthru
    _
  // Predicated region
  $region10: #{mlp_pallas.1} parent=0 // pred_check
    _
  $region11: #{mlp_pallas.1} parent=0 // pred_check_branch
    %15 = sbr.rel (0) target = $region13
  $region12: #{mlp_pallas.1} parent=0 // pred_region
    _
  $region13: #{mlp_pallas.1} parent=0 // pred_fallthru
    _
  // Predicated region
  $region14: #{mlp_pallas.1} parent=0 // pred_check
    _
  $region15: #{mlp_pallas.1} parent=0 // pred_check_branch
    %17 = sbr.rel (0) target = $region17
  $region16: #{mlp_pallas.1} parent=0 // pred_region
    _
  $region17: #{mlp_pallas.1} parent=0 // pred_fallthru
    _
  // Predicated region
  $region18: #{mlp_pallas.1} parent=0 // pred_check
    _
  $region19: #{mlp_pallas.1} parent=0 // pred_check_branch
    %19 = sbr.rel (0) target = $region21
  $region20: #{mlp_pallas.1} parent=0 // pred_region
    _
  $region21: #{mlp_pallas.1} parent=0 // pred_fallthru
    _
  %p20 = scmp.eq.s32.totalorder 0, 0
  // Predicated region
  $region22: #{mlp_pallas.1} parent=0 // pred_check
    %p21 = pneg %p20
  $region23: #{mlp_pallas.1} parent=0 // pred_check_branch
    %23 = sbr.rel (%p21) target = $region25
  $region24: #{mlp_pallas.1} parent=0 // pred_region
    %24 = vst [vmem:[#allocation2] sm:$0xff] 0.0
    %25 = vst [vmem:[#allocation2 + $0x8] sm:$0xff] 0.0
    %26 = vst [vmem:[#allocation2 + $0x10] sm:$0xff] 0.0
    %27 = vst [vmem:[#allocation2 + $0x18] sm:$0xff] 0.0
    %28 = vst [vmem:[#allocation2 + $0x20] sm:$0xff] 0.0
    %29 = vst [vmem:[#allocation2 + $0x28] sm:$0xff] 0.0
    %30 = vst [vmem:[#allocation2 + $0x30] sm:$0xff] 0.0
    %31 = vst [vmem:[#allocation2 + $0x38] sm:$0xff] 0.0
    %32 = vst [vmem:[#allocation2 + $0x40] sm:$0xff] 0.0
    %33 = vst [vmem:[#allocation2 + $0x48] sm:$0xff] 0.0
    %34 = vst [vmem:[#allocation2 + $0x50] sm:$0xff] 0.0
    %35 = vst [vmem:[#allocation2 + $0x58] sm:$0xff] 0.0
    %36 = vst [vmem:[#allocation2 + $0x60] sm:$0xff] 0.0
    %37 = vst [vmem:[#allocation2 + $0x68] sm:$0xff] 0.0
    %38 = vst [vmem:[#allocation2 + $0x70] sm:$0xff] 0.0
    %39 = vst [vmem:[#allocation2 + $0x78] sm:$0xff] 0.0
  $region25: #{mlp_pallas.1} parent=0 // pred_fallthru
    _
  %v40 = vld [vmem:[%s0] sm:$0xff]
  %v41 = vld [vmem:[%s0 + $0x8] sm:$0xff]
  %v42 = vld [vmem:[%s0 + $0x10] sm:$0xff]
  %v43 = vld [vmem:[%s0 + $0x18] sm:$0xff]
  %v44 = vld [vmem:[%s0 + $0x20] sm:$0xff]
  %v45 = vld [vmem:[%s0 + $0x28] sm:$0xff]
  %v46 = vld [vmem:[%s0 + $0x30] sm:$0xff]
  %v47 = vld [vmem:[%s0 + $0x38] sm:$0xff]
  %v48 = vld [vmem:[%s0 + $0x40] sm:$0xff]
  %v49 = vld [vmem:[%s0 + $0x48] sm:$0xff]
  %v50 = vld [vmem:[%s0 + $0x50] sm:$0xff]
  %v51 = vld [vmem:[%s0 + $0x58] sm:$0xff]
  %v52 = vld [vmem:[%s0 + $0x60] sm:$0xff]
  %v53 = vld [vmem:[%s0 + $0x68] sm:$0xff]
  %v54 = vld [vmem:[%s0 + $0x70] sm:$0xff]
  %v55 = vld [vmem:[%s0 + $0x78] sm:$0xff]
  %v56 = vld [vmem:[%s1] sm:$0xff]
  %v57 = vld [vmem:[%s1 + $0x8] sm:$0xff]
  %v58 = vld [vmem:[%s1 + $0x10] sm:$0xff]
  %v59 = vld [vmem:[%s1 + $0x18] sm:$0xff]
  %v60 = vld [vmem:[%s1 + $0x20] sm:$0xff]
  %v61 = vld [vmem:[%s1 + $0x28] sm:$0xff]
  %v62 = vld [vmem:[%s1 + $0x30] sm:$0xff]
  %v63 = vld [vmem:[%s1 + $0x38] sm:$0xff]
  %v64 = vld [vmem:[%s1 + $0x40] sm:$0xff]
  %v65 = vld [vmem:[%s1 + $0x48] sm:$0xff]
  %v66 = vld [vmem:[%s1 + $0x50] sm:$0xff]
  %v67 = vld [vmem:[%s1 + $0x58] sm:$0xff]
  %v68 = vld [vmem:[%s1 + $0x60] sm:$0xff]
  %v69 = vld [vmem:[%s1 + $0x68] sm:$0xff]
  %v70 = vld [vmem:[%s1 + $0x70] sm:$0xff]
  %v71 = vld [vmem:[%s1 + $0x78] sm:$0xff]
  %v72 = vld [vmem:[%s2] sm:$0x1]
  %v74 = vperm.slane %v72, 0
  %76 = vmatpush.msra.mxu0 %v71
  %77 = vmatpush.msra.mxu0 %v70
  %78 = vmatpush.msra.mxu0 %v69
  %79 = vmatpush.msra.mxu0 %v68
  %80 = vmatpush.msra.mxu0 %v67
  %81 = vmatpush.msra.mxu0 %v66
  %82 = vmatpush.msra.mxu0 %v65
  %83 = vmatpush.msra.mxu0 %v64
  %84 = vmatpush.msra.mxu0 %v63
  %85 = vmatpush.msra.mxu0 %v62
  %86 = vmatpush.msra.mxu0 %v61
  %87 = vmatpush.msra.mxu0 %v60
  %88 = vmatpush.msra.mxu0 %v59
  %89 = vmatpush.msra.mxu0 %v58
  %90 = vmatpush.msra.mxu0 %v57
  %91 = vmatpush.msra.mxu0 %v56
  %92 = vmatmul.f32.gmra.mxu0 %v40
  %v93 = vpop.f32.mrf.mxu0
  %v94 = vadd.f32 %v74, %v93
  %95 = vmatmul.f32.gmra.mxu0 %v41
  %v96 = vpop.f32.mrf.mxu0
  %v97 = vadd.f32 %v74, %v96
  %98 = vmatmul.f32.gmra.mxu0 %v42
  %v99 = vpop.f32.mrf.mxu0
  %v100 = vadd.f32 %v74, %v99
  %101 = vmatmul.f32.gmra.mxu0 %v43
  %v102 = vpop.f32.mrf.mxu0
  %v103 = vadd.f32 %v74, %v102
  %104 = vmatmul.f32.gmra.mxu0 %v44
  %v105 = vpop.f32.mrf.mxu0
  %v106 = vadd.f32 %v74, %v105
  %107 = vmatmul.f32.gmra.mxu0 %v45
  %v108 = vpop.f32.mrf.mxu0
  %v109 = vadd.f32 %v74, %v108
  %110 = vmatmul.f32.gmra.mxu0 %v46
  %v111 = vpop.f32.mrf.mxu0
  %v112 = vadd.f32 %v74, %v111
  %113 = vmatmul.f32.gmra.mxu0 %v47
  %v114 = vpop.f32.mrf.mxu0
  %v115 = vadd.f32 %v74, %v114
  %116 = vmatmul.f32.gmra.mxu0 %v48
  %v117 = vpop.f32.mrf.mxu0
  %v118 = vadd.f32 %v74, %v117
  %119 = vmatmul.f32.gmra.mxu0 %v49
  %v120 = vpop.f32.mrf.mxu0
  %v121 = vadd.f32 %v74, %v120
  %122 = vmatmul.f32.gmra.mxu0 %v50
  %v123 = vpop.f32.mrf.mxu0
  %v124 = vadd.f32 %v74, %v123
  %125 = vmatmul.f32.gmra.mxu0 %v51
  %v126 = vpop.f32.mrf.mxu0
  %v127 = vadd.f32 %v74, %v126
  %128 = vmatmul.f32.gmra.mxu0 %v52
  %v129 = vpop.f32.mrf.mxu0
  %v130 = vadd.f32 %v74, %v129
  %131 = vmatmul.f32.gmra.mxu0 %v53
  %v132 = vpop.f32.mrf.mxu0
  %v133 = vadd.f32 %v74, %v132
  %134 = vmatmul.f32.gmra.mxu0 %v54
  %v135 = vpop.f32.mrf.mxu0
  %v136 = vadd.f32 %v74, %v135
  %137 = vmatmul.f32.gmra.mxu0 %v55
  %v138 = vpop.f32.mrf.mxu0
  %v139 = vadd.f32 %v74, %v138
  %140 = vdwg.mxu0
  %v141 = vmul.f32 %v94, 0.5
  %v142 = vmul.f32 %v97, 0.5
  %v143 = vmul.f32 %v100, 0.5
  %v144 = vmul.f32 %v103, 0.5
  %v145 = vmul.f32 %v106, 0.5
  %v146 = vmul.f32 %v109, 0.5
  %v147 = vmul.f32 %v112, 0.5
  %v148 = vmul.f32 %v115, 0.5
  %v149 = vmul.f32 %v118, 0.5
  %v150 = vmul.f32 %v121, 0.5
  %v151 = vmul.f32 %v124, 0.5
  %v152 = vmul.f32 %v127, 0.5
  %v153 = vmul.f32 %v130, 0.5
  %v154 = vmul.f32 %v133, 0.5
  %v155 = vmul.f32 %v136, 0.5
  %v156 = vmul.f32 %v139, 0.5
  %v157 = vmul.f32 %v94, 0.70710677
  %v158 = vmul.f32 %v97, 0.70710677
  %v159 = vmul.f32 %v100, 0.70710677
  %v160 = vmul.f32 %v103, 0.70710677
  %v161 = vmul.f32 %v106, 0.70710677
  %v162 = vmul.f32 %v109, 0.70710677
  %v163 = vmul.f32 %v112, 0.70710677
  %v164 = vmul.f32 %v115, 0.70710677
  %v165 = vmul.f32 %v118, 0.70710677
  %v166 = vmul.f32 %v121, 0.70710677
  %v167 = vmul.f32 %v124, 0.70710677
  %v168 = vmul.f32 %v127, 0.70710677
  %v169 = vmul.f32 %v130, 0.70710677
  %v170 = vmul.f32 %v133, 0.70710677
  %v171 = vmul.f32 %v136, 0.70710677
  %v172 = vmul.f32 %v139, 0.70710677
  %v173 = vmul.f32 %v157, %v157
  %v174 = vmin.f32 16.0, %v173
  %v175 = vmul.f32 %v174, 2.1237322e-06
  %v176 = vadd.f32 %v175, 0.00028619796
  %v177 = vmul.f32 %v174, %v176
  %v178 = vadd.f32 %v177, 0.0036580483
  %v179 = vmul.f32 %v174, %v178
  %v180 = vadd.f32 %v179, 0.05243302
  %v181 = vmul.f32 %v174, %v180
  %v182 = vadd.f32 %v181, 0.18741608
  %v183 = vmul.f32 %v174, %v182
  %v184 = vadd.f32 %v183, 1.1283791
  %v185 = vmul.f32 %v157, %v184
  %v186 = vmul.f32 %v174, 3.8918573e-05
  %v187 = vadd.f32 %v186, 0.001143296
  %v188 = vmul.f32 %v174, %v187
  %v189 = vadd.f32 %v188, 0.014752088
  %v190 = vmul.f32 %v174, %v189
  %v191 = vadd.f32 %v190, 0.112945676
  %v192 = vmul.f32 %v174, %v191
  %v193 = vadd.f32 %v192, 0.4994258
  %v194 = vmul.f32 %v174, %v193
  %v195 = vadd.f32 %v194, 1.0
  %v196 = vrcp.pop %v195
  %v197 = vmul.f32 %v195, %v196
  %v198 = vsub.f32 1.0, %v197
  %v199 = vmul.f32 %v196, %v198
  %v200 = vadd.f32 %v196, %v199
  %vm201 = vweird.f32 %v195
  %vm202 = vweird.f32 %v196
  %vm203 = vmor %vm201, %vm202
  %v204 = vsel %vm203, %v196, %v200
  %v205 = vand.u32 2147483647, %v195
  %vm206 = vcmp.eq.f32.partialorder %v205, 8.507059e+37
  %v207 = vand.u32 %v195, 2147483648
  %v208 = vor.u32 1.1754944e-38, %v207
  %v209 = vsel %vm206, %v208, %v204
  %v210 = vmul.f32 %v185, %v209
  %v211 = vmin.f32 %v210, 1.0
  %v212 = vmax.f32 %v211, -1.0
  %v213 = vmul.f32 %v158, %v158
  %v214 = vmin.f32 16.0, %v213
  %v215 = vmul.f32 %v214, 2.1237322e-06
  %v216 = vadd.f32 %v215, 0.00028619796
  %v217 = vmul.f32 %v214, %v216
  %v218 = vadd.f32 %v217, 0.0036580483
  %v219 = vmul.f32 %v214, %v218
  %v220 = vadd.f32 %v219, 0.05243302
  %v221 = vmul.f32 %v214, %v220
  %v222 = vadd.f32 %v221, 0.18741608
  %v223 = vmul.f32 %v214, %v222
  %v224 = vadd.f32 %v223, 1.1283791
  %v225 = vmul.f32 %v158, %v224
  %v226 = vmul.f32 %v214, 3.8918573e-05
  %v227 = vadd.f32 %v226, 0.001143296
  %v228 = vmul.f32 %v214, %v227
  %v229 = vadd.f32 %v228, 0.014752088
  %v230 = vmul.f32 %v214, %v229
  %v231 = vadd.f32 %v230, 0.112945676
  %v232 = vmul.f32 %v214, %v231
  %v233 = vadd.f32 %v232, 0.4994258
  %v234 = vmul.f32 %v214, %v233
  %v235 = vadd.f32 %v234, 1.0
  %v236 = vrcp.pop %v235
  %v237 = vmul.f32 %v235, %v236
  %v238 = vsub.f32 1.0, %v237
  %v239 = vmul.f32 %v236, %v238
  %v240 = vadd.f32 %v236, %v239
  %vm241 = vweird.f32 %v235
  %vm242 = vweird.f32 %v236
  %vm243 = vmor %vm241, %vm242
  %v244 = vsel %vm243, %v236, %v240
  %v245 = vand.u32 2147483647, %v235
  %vm246 = vcmp.eq.f32.partialorder %v245, 8.507059e+37
  %v247 = vand.u32 %v235, 2147483648
  %v248 = vor.u32 1.1754944e-38, %v247
  %v249 = vsel %vm246, %v248, %v244
  %v250 = vmul.f32 %v225, %v249
  %v251 = vmin.f32 %v250, 1.0
  %v252 = vmax.f32 %v251, -1.0
  %v253 = vmul.f32 %v159, %v159
  %v254 = vmin.f32 16.0, %v253
  %v255 = vmul.f32 %v254, 2.1237322e-06
  %v256 = vadd.f32 %v255, 0.00028619796
  %v257 = vmul.f32 %v254, %v256
  %v258 = vadd.f32 %v257, 0.0036580483
  %v259 = vmul.f32 %v254, %v258
  %v260 = vadd.f32 %v259, 0.05243302
  %v261 = vmul.f32 %v254, %v260
  %v262 = vadd.f32 %v261, 0.18741608
  %v263 = vmul.f32 %v254, %v262
  %v264 = vadd.f32 %v263, 1.1283791
  %v265 = vmul.f32 %v159, %v264
  %v266 = vmul.f32 %v254, 3.8918573e-05
  %v267 = vadd.f32 %v266, 0.001143296
  %v268 = vmul.f32 %v254, %v267
  %v269 = vadd.f32 %v268, 0.014752088
  %v270 = vmul.f32 %v254, %v269
  %v271 = vadd.f32 %v270, 0.112945676
  %v272 = vmul.f32 %v254, %v271
  %v273 = vadd.f32 %v272, 0.4994258
  %v274 = vmul.f32 %v254, %v273
  %v275 = vadd.f32 %v274, 1.0
  %v276 = vrcp.pop %v275
  %v277 = vmul.f32 %v275, %v276
  %v278 = vsub.f32 1.0, %v277
  %v279 = vmul.f32 %v276, %v278
  %v280 = vadd.f32 %v276, %v279
  %vm281 = vweird.f32 %v275
  %vm282 = vweird.f32 %v276
  %vm283 = vmor %vm281, %vm282
  %v284 = vsel %vm283, %v276, %v280
  %v285 = vand.u32 2147483647, %v275
  %vm286 = vcmp.eq.f32.partialorder %v285, 8.507059e+37
  %v287 = vand.u32 %v275, 2147483648
  %v288 = vor.u32 1.1754944e-38, %v287
  %v289 = vsel %vm286, %v288, %v284
  %v290 = vmul.f32 %v265, %v289
  %v291 = vmin.f32 %v290, 1.0
  %v292 = vmax.f32 %v291, -1.0
  %v293 = vmul.f32 %v160, %v160
  %v294 = vmin.f32 16.0, %v293
  %v295 = vmul.f32 %v294, 2.1237322e-06
  %v296 = vadd.f32 %v295, 0.00028619796
  %v297 = vmul.f32 %v294, %v296
  %v298 = vadd.f32 %v297, 0.0036580483
  %v299 = vmul.f32 %v294, %v298
  %v300 = vadd.f32 %v299, 0.05243302
  %v301 = vmul.f32 %v294, %v300
  %v302 = vadd.f32 %v301, 0.18741608
  %v303 = vmul.f32 %v294, %v302
  %v304 = vadd.f32 %v303, 1.1283791
  %v305 = vmul.f32 %v160, %v304
  %v306 = vmul.f32 %v294, 3.8918573e-05
  %v307 = vadd.f32 %v306, 0.001143296
  %v308 = vmul.f32 %v294, %v307
  %v309 = vadd.f32 %v308, 0.014752088
  %v310 = vmul.f32 %v294, %v309
  %v311 = vadd.f32 %v310, 0.112945676
  %v312 = vmul.f32 %v294, %v311
  %v313 = vadd.f32 %v312, 0.4994258
  %v314 = vmul.f32 %v294, %v313
  %v315 = vadd.f32 %v314, 1.0
  %v316 = vrcp.pop %v315
  %v317 = vmul.f32 %v315, %v316
  %v318 = vsub.f32 1.0, %v317
  %v319 = vmul.f32 %v316, %v318
  %v320 = vadd.f32 %v316, %v319
  %vm321 = vweird.f32 %v315
  %vm322 = vweird.f32 %v316
  %vm323 = vmor %vm321, %vm322
  %v324 = vsel %vm323, %v316, %v320
  %v325 = vand.u32 2147483647, %v315
  %vm326 = vcmp.eq.f32.partialorder %v325, 8.507059e+37
  %v327 = vand.u32 %v315, 2147483648
  %v328 = vor.u32 1.1754944e-38, %v327
  %v329 = vsel %vm326, %v328, %v324
  %v330 = vmul.f32 %v305, %v329
  %v331 = vmin.f32 %v330, 1.0
  %v332 = vmax.f32 %v331, -1.0
  %v333 = vmul.f32 %v161, %v161
  %v334 = vmin.f32 16.0, %v333
  %v335 = vmul.f32 %v334, 2.1237322e-06
  %v336 = vadd.f32 %v335, 0.00028619796
  %v337 = vmul.f32 %v334, %v336
  %v338 = vadd.f32 %v337, 0.0036580483
  %v339 = vmul.f32 %v334, %v338
  %v340 = vadd.f32 %v339, 0.05243302
  %v341 = vmul.f32 %v334, %v340
  %v342 = vadd.f32 %v341, 0.18741608
  %v343 = vmul.f32 %v334, %v342
  %v344 = vadd.f32 %v343, 1.1283791
  %v345 = vmul.f32 %v161, %v344
  %v346 = vmul.f32 %v334, 3.8918573e-05
  %v347 = vadd.f32 %v346, 0.001143296
  %v348 = vmul.f32 %v334, %v347
  %v349 = vadd.f32 %v348, 0.014752088
  %v350 = vmul.f32 %v334, %v349
  %v351 = vadd.f32 %v350, 0.112945676
  %v352 = vmul.f32 %v334, %v351
  %v353 = vadd.f32 %v352, 0.4994258
  %v354 = vmul.f32 %v334, %v353
  %v355 = vadd.f32 %v354, 1.0
  %v356 = vrcp.pop %v355
  %v357 = vmul.f32 %v355, %v356
  %v358 = vsub.f32 1.0, %v357
  %v359 = vmul.f32 %v356, %v358
  %v360 = vadd.f32 %v356, %v359
  %vm361 = vweird.f32 %v355
  %vm362 = vweird.f32 %v356
  %vm363 = vmor %vm361, %vm362
  %v364 = vsel %vm363, %v356, %v360
  %v365 = vand.u32 2147483647, %v355
  %vm366 = vcmp.eq.f32.partialorder %v365, 8.507059e+37
  %v367 = vand.u32 %v355, 2147483648
  %v368 = vor.u32 1.1754944e-38, %v367
  %v369 = vsel %vm366, %v368, %v364
  %v370 = vmul.f32 %v345, %v369
  %v371 = vmin.f32 %v370, 1.0
  %v372 = vmax.f32 %v371, -1.0
  %v373 = vmul.f32 %v162, %v162
  %v374 = vmin.f32 16.0, %v373
  %v375 = vmul.f32 %v374, 2.1237322e-06
  %v376 = vadd.f32 %v375, 0.00028619796
  %v377 = vmul.f32 %v374, %v376
  %v378 = vadd.f32 %v377, 0.0036580483
  %v379 = vmul.f32 %v374, %v378
  %v380 = vadd.f32 %v379, 0.05243302
  %v381 = vmul.f32 %v374, %v380
  %v382 = vadd.f32 %v381, 0.18741608
  %v383 = vmul.f32 %v374, %v382
  %v384 = vadd.f32 %v383, 1.1283791
  %v385 = vmul.f32 %v162, %v384
  %v386 = vmul.f32 %v374, 3.8918573e-05
  %v387 = vadd.f32 %v386, 0.001143296
  %v388 = vmul.f32 %v374, %v387
  %v389 = vadd.f32 %v388, 0.014752088
  %v390 = vmul.f32 %v374, %v389
  %v391 = vadd.f32 %v390, 0.112945676
  %v392 = vmul.f32 %v374, %v391
  %v393 = vadd.f32 %v392, 0.4994258
  %v394 = vmul.f32 %v374, %v393
  %v395 = vadd.f32 %v394, 1.0
  %v396 = vrcp.pop %v395
  %v397 = vmul.f32 %v395, %v396
  %v398 = vsub.f32 1.0, %v397
  %v399 = vmul.f32 %v396, %v398
  %v400 = vadd.f32 %v396, %v399
  %vm401 = vweird.f32 %v395
  %vm402 = vweird.f32 %v396
  %vm403 = vmor %vm401, %vm402
  %v404 = vsel %vm403, %v396, %v400
  %v405 = vand.u32 2147483647, %v395
  %vm406 = vcmp.eq.f32.partialorder %v405, 8.507059e+37
  %v407 = vand.u32 %v395, 2147483648
  %v408 = vor.u32 1.1754944e-38, %v407
  %v409 = vsel %vm406, %v408, %v404
  %v410 = vmul.f32 %v385, %v409
  %v411 = vmin.f32 %v410, 1.0
  %v412 = vmax.f32 %v411, -1.0
  %v413 = vmul.f32 %v163, %v163
  %v414 = vmin.f32 16.0, %v413
  %v415 = vmul.f32 %v414, 2.1237322e-06
  %v416 = vadd.f32 %v415, 0.00028619796
  %v417 = vmul.f32 %v414, %v416
  %v418 = vadd.f32 %v417, 0.0036580483
  %v419 = vmul.f32 %v414, %v418
  %v420 = vadd.f32 %v419, 0.05243302
  %v421 = vmul.f32 %v414, %v420
  %v422 = vadd.f32 %v421, 0.18741608
  %v423 = vmul.f32 %v414, %v422
  %v424 = vadd.f32 %v423, 1.1283791
  %v425 = vmul.f32 %v163, %v424
  %v426 = vmul.f32 %v414, 3.8918573e-05
  %v427 = vadd.f32 %v426, 0.001143296
  %v428 = vmul.f32 %v414, %v427
  %v429 = vadd.f32 %v428, 0.014752088
  %v430 = vmul.f32 %v414, %v429
  %v431 = vadd.f32 %v430, 0.112945676
  %v432 = vmul.f32 %v414, %v431
  %v433 = vadd.f32 %v432, 0.4994258
  %v434 = vmul.f32 %v414, %v433
  %v435 = vadd.f32 %v434, 1.0
  %v436 = vrcp.pop %v435
  %v437 = vmul.f32 %v435, %v436
  %v438 = vsub.f32 1.0, %v437
  %v439 = vmul.f32 %v436, %v438
  %v440 = vadd.f32 %v436, %v439
  %vm441 = vweird.f32 %v435
  %vm442 = vweird.f32 %v436
  %vm443 = vmor %vm441, %vm442
  %v444 = vsel %vm443, %v436, %v440
  %v445 = vand.u32 2147483647, %v435
  %vm446 = vcmp.eq.f32.partialorder %v445, 8.507059e+37
  %v447 = vand.u32 %v435, 2147483648
  %v448 = vor.u32 1.1754944e-38, %v447
  %v449 = vsel %vm446, %v448, %v444
  %v450 = vmul.f32 %v425, %v449
  %v451 = vmin.f32 %v450, 1.0
  %v452 = vmax.f32 %v451, -1.0
  %v453 = vmul.f32 %v164, %v164
  %v454 = vmin.f32 16.0, %v453
  %v455 = vmul.f32 %v454, 2.1237322e-06
  %v456 = vadd.f32 %v455, 0.00028619796
  %v457 = vmul.f32 %v454, %v456
  %v458 = vadd.f32 %v457, 0.0036580483
  %v459 = vmul.f32 %v454, %v458
  %v460 = vadd.f32 %v459, 0.05243302
  %v461 = vmul.f32 %v454, %v460
  %v462 = vadd.f32 %v461, 0.18741608
  %v463 = vmul.f32 %v454, %v462
  %v464 = vadd.f32 %v463, 1.1283791
  %v465 = vmul.f32 %v164, %v464
  %v466 = vmul.f32 %v454, 3.8918573e-05
  %v467 = vadd.f32 %v466, 0.001143296
  %v468 = vmul.f32 %v454, %v467
  %v469 = vadd.f32 %v468, 0.014752088
  %v470 = vmul.f32 %v454, %v469
  %v471 = vadd.f32 %v470, 0.112945676
  %v472 = vmul.f32 %v454, %v471
  %v473 = vadd.f32 %v472, 0.4994258
  %v474 = vmul.f32 %v454, %v473
  %v475 = vadd.f32 %v474, 1.0
  %v476 = vrcp.pop %v475
  %v477 = vmul.f32 %v475, %v476
  %v478 = vsub.f32 1.0, %v477
  %v479 = vmul.f32 %v476, %v478
  %v480 = vadd.f32 %v476, %v479
  %vm481 = vweird.f32 %v475
  %vm482 = vweird.f32 %v476
  %vm483 = vmor %vm481, %vm482
  %v484 = vsel %vm483, %v476, %v480
  %v485 = vand.u32 2147483647, %v475
  %vm486 = vcmp.eq.f32.partialorder %v485, 8.507059e+37
  %v487 = vand.u32 %v475, 2147483648
  %v488 = vor.u32 1.1754944e-38, %v487
  %v489 = vsel %vm486, %v488, %v484
  %v490 = vmul.f32 %v465, %v489
  %v491 = vmin.f32 %v490, 1.0
  %v492 = vmax.f32 %v491, -1.0
  %v493 = vmul.f32 %v165, %v165
  %v494 = vmin.f32 16.0, %v493
  %v495 = vmul.f32 %v494, 2.1237322e-06
  %v496 = vadd.f32 %v495, 0.00028619796
  %v497 = vmul.f32 %v494, %v496
  %v498 = vadd.f32 %v497, 0.0036580483
  %v499 = vmul.f32 %v494, %v498
  %v500 = vadd.f32 %v499, 0.05243302
  %v501 = vmul.f32 %v494, %v500
  %v502 = vadd.f32 %v501, 0.18741608
  %v503 = vmul.f32 %v494, %v502
  %v504 = vadd.f32 %v503, 1.1283791
  %v505 = vmul.f32 %v165, %v504
  %v506 = vmul.f32 %v494, 3.8918573e-05
  %v507 = vadd.f32 %v506, 0.001143296
  %v508 = vmul.f32 %v494, %v507
  %v509 = vadd.f32 %v508, 0.014752088
  %v510 = vmul.f32 %v494, %v509
  %v511 = vadd.f32 %v510, 0.112945676
  %v512 = vmul.f32 %v494, %v511
  %v513 = vadd.f32 %v512, 0.4994258
  %v514 = vmul.f32 %v494, %v513
  %v515 = vadd.f32 %v514, 1.0
  %v516 = vrcp.pop %v515
  %v517 = vmul.f32 %v515, %v516
  %v518 = vsub.f32 1.0, %v517
  %v519 = vmul.f32 %v516, %v518
  %v520 = vadd.f32 %v516, %v519
  %vm521 = vweird.f32 %v515
  %vm522 = vweird.f32 %v516
  %vm523 = vmor %vm521, %vm522
  %v524 = vsel %vm523, %v516, %v520
  %v525 = vand.u32 2147483647, %v515
  %vm526 = vcmp.eq.f32.partialorder %v525, 8.507059e+37
  %v527 = vand.u32 %v515, 2147483648
  %v528 = vor.u32 1.1754944e-38, %v527
  %v529 = vsel %vm526, %v528, %v524
  %v530 = vmul.f32 %v505, %v529
  %v531 = vmin.f32 %v530, 1.0
  %v532 = vmax.f32 %v531, -1.0
  %v533 = vmul.f32 %v166, %v166
  %v534 = vmin.f32 16.0, %v533
  %v535 = vmul.f32 %v534, 2.1237322e-06
  %v536 = vadd.f32 %v535, 0.00028619796
  %v537 = vmul.f32 %v534, %v536
  %v538 = vadd.f32 %v537, 0.0036580483
  %v539 = vmul.f32 %v534, %v538
  %v540 = vadd.f32 %v539, 0.05243302
  %v541 = vmul.f32 %v534, %v540
  %v542 = vadd.f32 %v541, 0.18741608
  %v543 = vmul.f32 %v534, %v542
  %v544 = vadd.f32 %v543, 1.1283791
  %v545 = vmul.f32 %v166, %v544
  %v546 = vmul.f32 %v534, 3.8918573e-05
  %v547 = vadd.f32 %v546, 0.001143296
  %v548 = vmul.f32 %v534, %v547
  %v549 = vadd.f32 %v548, 0.014752088
  %v550 = vmul.f32 %v534, %v549
  %v551 = vadd.f32 %v550, 0.112945676
  %v552 = vmul.f32 %v534, %v551
  %v553 = vadd.f32 %v552, 0.4994258
  %v554 = vmul.f32 %v534, %v553
  %v555 = vadd.f32 %v554, 1.0
  %v556 = vrcp.pop %v555
  %v557 = vmul.f32 %v555, %v556
  %v558 = vsub.f32 1.0, %v557
  %v559 = vmul.f32 %v556, %v558
  %v560 = vadd.f32 %v556, %v559
  %vm561 = vweird.f32 %v555
  %vm562 = vweird.f32 %v556
  %vm563 = vmor %vm561, %vm562
  %v564 = vsel %vm563, %v556, %v560
  %v565 = vand.u32 2147483647, %v555
  %vm566 = vcmp.eq.f32.partialorder %v565, 8.507059e+37
  %v567 = vand.u32 %v555, 2147483648
  %v568 = vor.u32 1.1754944e-38, %v567
  %v569 = vsel %vm566, %v568, %v564
  %v570 = vmul.f32 %v545, %v569
  %v571 = vmin.f32 %v570, 1.0
  %v572 = vmax.f32 %v571, -1.0
  %v573 = vmul.f32 %v167, %v167
  %v574 = vmin.f32 16.0, %v573
  %v575 = vmul.f32 %v574, 2.1237322e-06
  %v576 = vadd.f32 %v575, 0.00028619796
  %v577 = vmul.f32 %v574, %v576
  %v578 = vadd.f32 %v577, 0.0036580483
  %v579 = vmul.f32 %v574, %v578
  %v580 = vadd.f32 %v579, 0.05243302
  %v581 = vmul.f32 %v574, %v580
  %v582 = vadd.f32 %v581, 0.18741608
  %v583 = vmul.f32 %v574, %v582
  %v584 = vadd.f32 %v583, 1.1283791
  %v585 = vmul.f32 %v167, %v584
  %v586 = vmul.f32 %v574, 3.8918573e-05
  %v587 = vadd.f32 %v586, 0.001143296
  %v588 = vmul.f32 %v574, %v587
  %v589 = vadd.f32 %v588, 0.014752088
  %v590 = vmul.f32 %v574, %v589
  %v591 = vadd.f32 %v590, 0.112945676
  %v592 = vmul.f32 %v574, %v591
  %v593 = vadd.f32 %v592, 0.4994258
  %v594 = vmul.f32 %v574, %v593
  %v595 = vadd.f32 %v594, 1.0
  %v596 = vrcp.pop %v595
  %v597 = vmul.f32 %v595, %v596
  %v598 = vsub.f32 1.0, %v597
  %v599 = vmul.f32 %v596, %v598
  %v600 = vadd.f32 %v596, %v599
  %vm601 = vweird.f32 %v595
  %vm602 = vweird.f32 %v596
  %vm603 = vmor %vm601, %vm602
  %v604 = vsel %vm603, %v596, %v600
  %v605 = vand.u32 2147483647, %v595
  %vm606 = vcmp.eq.f32.partialorder %v605, 8.507059e+37
  %v607 = vand.u32 %v595, 2147483648
  %v608 = vor.u32 1.1754944e-38, %v607
  %v609 = vsel %vm606, %v608, %v604
  %v610 = vmul.f32 %v585, %v609
  %v611 = vmin.f32 %v610, 1.0
  %v612 = vmax.f32 %v611, -1.0
  %v613 = vmul.f32 %v168, %v168
  %v614 = vmin.f32 16.0, %v613
  %v615 = vmul.f32 %v614, 2.1237322e-06
  %v616 = vadd.f32 %v615, 0.00028619796
  %v617 = vmul.f32 %v614, %v616
  %v618 = vadd.f32 %v617, 0.0036580483
  %v619 = vmul.f32 %v614, %v618
  %v620 = vadd.f32 %v619, 0.05243302
  %v621 = vmul.f32 %v614, %v620
  %v622 = vadd.f32 %v621, 0.18741608
  %v623 = vmul.f32 %v614, %v622
  %v624 = vadd.f32 %v623, 1.1283791
  %v625 = vmul.f32 %v168, %v624
  %v626 = vmul.f32 %v614, 3.8918573e-05
  %v627 = vadd.f32 %v626, 0.001143296
  %v628 = vmul.f32 %v614, %v627
  %v629 = vadd.f32 %v628, 0.014752088
  %v630 = vmul.f32 %v614, %v629
  %v631 = vadd.f32 %v630, 0.112945676
  %v632 = vmul.f32 %v614, %v631
  %v633 = vadd.f32 %v632, 0.4994258
  %v634 = vmul.f32 %v614, %v633
  %v635 = vadd.f32 %v634, 1.0
  %v636 = vrcp.pop %v635
  %v637 = vmul.f32 %v635, %v636
  %v638 = vsub.f32 1.0, %v637
  %v639 = vmul.f32 %v636, %v638
  %v640 = vadd.f32 %v636, %v639
  %vm641 = vweird.f32 %v635
  %vm642 = vweird.f32 %v636
  %vm643 = vmor %vm641, %vm642
  %v644 = vsel %vm643, %v636, %v640
  %v645 = vand.u32 2147483647, %v635
  %vm646 = vcmp.eq.f32.partialorder %v645, 8.507059e+37
  %v647 = vand.u32 %v635, 2147483648
  %v648 = vor.u32 1.1754944e-38, %v647
  %v649 = vsel %vm646, %v648, %v644
  %v650 = vmul.f32 %v625, %v649
  %v651 = vmin.f32 %v650, 1.0
  %v652 = vmax.f32 %v651, -1.0
  %v653 = vmul.f32 %v169, %v169
  %v654 = vmin.f32 16.0, %v653
  %v655 = vmul.f32 %v654, 2.1237322e-06
  %v656 = vadd.f32 %v655, 0.00028619796
  %v657 = vmul.f32 %v654, %v656
  %v658 = vadd.f32 %v657, 0.0036580483
  %v659 = vmul.f32 %v654, %v658
  %v660 = vadd.f32 %v659, 0.05243302
  %v661 = vmul.f32 %v654, %v660
  %v662 = vadd.f32 %v661, 0.18741608
  %v663 = vmul.f32 %v654, %v662
  %v664 = vadd.f32 %v663, 1.1283791
  %v665 = vmul.f32 %v169, %v664
  %v666 = vmul.f32 %v654, 3.8918573e-05
  %v667 = vadd.f32 %v666, 0.001143296
  %v668 = vmul.f32 %v654, %v667
  %v669 = vadd.f32 %v668, 0.014752088
  %v670 = vmul.f32 %v654, %v669
  %v671 = vadd.f32 %v670, 0.112945676
  %v672 = vmul.f32 %v654, %v671
  %v673 = vadd.f32 %v672, 0.4994258
  %v674 = vmul.f32 %v654, %v673
  %v675 = vadd.f32 %v674, 1.0
  %v676 = vrcp.pop %v675
  %v677 = vmul.f32 %v675, %v676
  %v678 = vsub.f32 1.0, %v677
  %v679 = vmul.f32 %v676, %v678
  %v680 = vadd.f32 %v676, %v679
  %vm681 = vweird.f32 %v675
  %vm682 = vweird.f32 %v676
  %vm683 = vmor %vm681, %vm682
  %v684 = vsel %vm683, %v676, %v680
  %v685 = vand.u32 2147483647, %v675
  %vm686 = vcmp.eq.f32.partialorder %v685, 8.507059e+37
  %v687 = vand.u32 %v675, 2147483648
  %v688 = vor.u32 1.1754944e-38, %v687
  %v689 = vsel %vm686, %v688, %v684
  %v690 = vmul.f32 %v665, %v689
  %v691 = vmin.f32 %v690, 1.0
  %v692 = vmax.f32 %v691, -1.0
  %v693 = vmul.f32 %v170, %v170
  %v694 = vmin.f32 16.0, %v693
  %v695 = vmul.f32 %v694, 2.1237322e-06
  %v696 = vadd.f32 %v695, 0.00028619796
  %v697 = vmul.f32 %v694, %v696
  %v698 = vadd.f32 %v697, 0.0036580483
  %v699 = vmul.f32 %v694, %v698
  %v700 = vadd.f32 %v699, 0.05243302
  %v701 = vmul.f32 %v694, %v700
  %v702 = vadd.f32 %v701, 0.18741608
  %v703 = vmul.f32 %v694, %v702
  %v704 = vadd.f32 %v703, 1.1283791
  %v705 = vmul.f32 %v170, %v704
  %v706 = vmul.f32 %v694, 3.8918573e-05
  %v707 = vadd.f32 %v706, 0.001143296
  %v708 = vmul.f32 %v694, %v707
  %v709 = vadd.f32 %v708, 0.014752088
  %v710 = vmul.f32 %v694, %v709
  %v711 = vadd.f32 %v710, 0.112945676
  %v712 = vmul.f32 %v694, %v711
  %v713 = vadd.f32 %v712, 0.4994258
  %v714 = vmul.f32 %v694, %v713
  %v715 = vadd.f32 %v714, 1.0
  %v716 = vrcp.pop %v715
  %v717 = vmul.f32 %v715, %v716
  %v718 = vsub.f32 1.0, %v717
  %v719 = vmul.f32 %v716, %v718
  %v720 = vadd.f32 %v716, %v719
  %vm721 = vweird.f32 %v715
  %vm722 = vweird.f32 %v716
  %vm723 = vmor %vm721, %vm722
  %v724 = vsel %vm723, %v716, %v720
  %v725 = vand.u32 2147483647, %v715
  %vm726 = vcmp.eq.f32.partialorder %v725, 8.507059e+37
  %v727 = vand.u32 %v715, 2147483648
  %v728 = vor.u32 1.1754944e-38, %v727
  %v729 = vsel %vm726, %v728, %v724
  %v730 = vmul.f32 %v705, %v729
  %v731 = vmin.f32 %v730, 1.0
  %v732 = vmax.f32 %v731, -1.0
  %v733 = vmul.f32 %v171, %v171
  %v734 = vmin.f32 16.0, %v733
  %v735 = vmul.f32 %v734, 2.1237322e-06
  %v736 = vadd.f32 %v735, 0.00028619796
  %v737 = vmul.f32 %v734, %v736
  %v738 = vadd.f32 %v737, 0.0036580483
  %v739 = vmul.f32 %v734, %v738
  %v740 = vadd.f32 %v739, 0.05243302
  %v741 = vmul.f32 %v734, %v740
  %v742 = vadd.f32 %v741, 0.18741608
  %v743 = vmul.f32 %v734, %v742
  %v744 = vadd.f32 %v743, 1.1283791
  %v745 = vmul.f32 %v171, %v744
  %v746 = vmul.f32 %v734, 3.8918573e-05
  %v747 = vadd.f32 %v746, 0.001143296
  %v748 = vmul.f32 %v734, %v747
  %v749 = vadd.f32 %v748, 0.014752088
  %v750 = vmul.f32 %v734, %v749
  %v751 = vadd.f32 %v750, 0.112945676
  %v752 = vmul.f32 %v734, %v751
  %v753 = vadd.f32 %v752, 0.4994258
  %v754 = vmul.f32 %v734, %v753
  %v755 = vadd.f32 %v754, 1.0
  %v756 = vrcp.pop %v755
  %v757 = vmul.f32 %v755, %v756
  %v758 = vsub.f32 1.0, %v757
  %v759 = vmul.f32 %v756, %v758
  %v760 = vadd.f32 %v756, %v759
  %vm761 = vweird.f32 %v755
  %vm762 = vweird.f32 %v756
  %vm763 = vmor %vm761, %vm762
  %v764 = vsel %vm763, %v756, %v760
  %v765 = vand.u32 2147483647, %v755
  %vm766 = vcmp.eq.f32.partialorder %v765, 8.507059e+37
  %v767 = vand.u32 %v755, 2147483648
  %v768 = vor.u32 1.1754944e-38, %v767
  %v769 = vsel %vm766, %v768, %v764
  %v770 = vmul.f32 %v745, %v769
  %v771 = vmin.f32 %v770, 1.0
  %v772 = vmax.f32 %v771, -1.0
  %v773 = vmul.f32 %v172, %v172
  %v774 = vmin.f32 16.0, %v773
  %v775 = vmul.f32 %v774, 2.1237322e-06
  %v776 = vadd.f32 %v775, 0.00028619796
  %v777 = vmul.f32 %v774, %v776
  %v778 = vadd.f32 %v777, 0.0036580483
  %v779 = vmul.f32 %v774, %v778
  %v780 = vadd.f32 %v779, 0.05243302
  %v781 = vmul.f32 %v774, %v780
  %v782 = vadd.f32 %v781, 0.18741608
  %v783 = vmul.f32 %v774, %v782
  %v784 = vadd.f32 %v783, 1.1283791
  %v785 = vmul.f32 %v172, %v784
  %v786 = vmul.f32 %v774, 3.8918573e-05
  %v787 = vadd.f32 %v786, 0.001143296
  %v788 = vmul.f32 %v774, %v787
  %v789 = vadd.f32 %v788, 0.014752088
  %v790 = vmul.f32 %v774, %v789
  %v791 = vadd.f32 %v790, 0.112945676
  %v792 = vmul.f32 %v774, %v791
  %v793 = vadd.f32 %v792, 0.4994258
  %v794 = vmul.f32 %v774, %v793
  %v795 = vadd.f32 %v794, 1.0
  %v796 = vrcp.pop %v795
  %v797 = vmul.f32 %v795, %v796
  %v798 = vsub.f32 1.0, %v797
  %v799 = vmul.f32 %v796, %v798
  %v800 = vadd.f32 %v796, %v799
  %vm801 = vweird.f32 %v795
  %vm802 = vweird.f32 %v796
  %vm803 = vmor %vm801, %vm802
  %v804 = vsel %vm803, %v796, %v800
  %v805 = vand.u32 2147483647, %v795
  %vm806 = vcmp.eq.f32.partialorder %v805, 8.507059e+37
  %v807 = vand.u32 %v795, 2147483648
  %v808 = vor.u32 1.1754944e-38, %v807
  %v809 = vsel %vm806, %v808, %v804
  %v810 = vmul.f32 %v785, %v809
  %v811 = vmin.f32 %v810, 1.0
  %v812 = vmax.f32 %v811, -1.0
  %v813 = vadd.f32 %v212, 1.0
  %v814 = vadd.f32 %v252, 1.0
  %v815 = vadd.f32 %v292, 1.0
  %v816 = vadd.f32 %v332, 1.0
  %v817 = vadd.f32 %v372, 1.0
  %v818 = vadd.f32 %v412, 1.0
  %v819 = vadd.f32 %v452, 1.0
  %v820 = vadd.f32 %v492, 1.0
  %v821 = vadd.f32 %v532, 1.0
  %v822 = vadd.f32 %v572, 1.0
  %v823 = vadd.f32 %v612, 1.0
  %v824 = vadd.f32 %v652, 1.0
  %v825 = vadd.f32 %v692, 1.0
  %v826 = vadd.f32 %v732, 1.0
  %v827 = vadd.f32 %v772, 1.0
  %v828 = vadd.f32 %v812, 1.0
  %v829 = vmul.f32 %v141, %v813
  %v830 = vmul.f32 %v142, %v814
  %v831 = vmul.f32 %v143, %v815
  %v832 = vmul.f32 %v144, %v816
  %v833 = vmul.f32 %v145, %v817
  %v834 = vmul.f32 %v146, %v818
  %v835 = vmul.f32 %v147, %v819
  %v836 = vmul.f32 %v148, %v820
  %v837 = vmul.f32 %v149, %v821
  %v838 = vmul.f32 %v150, %v822
  %v839 = vmul.f32 %v151, %v823
  %v840 = vmul.f32 %v152, %v824
  %v841 = vmul.f32 %v153, %v825
  %v842 = vmul.f32 %v154, %v826
  %v843 = vmul.f32 %v155, %v827
  %v844 = vmul.f32 %v156, %v828
  %v845 = vld [vmem:[#allocation2] sm:$0xff]
  %v846 = vld [vmem:[#allocation2 + $0x8] sm:$0xff]
  %v847 = vld [vmem:[#allocation2 + $0x10] sm:$0xff]
  %v848 = vld [vmem:[#allocation2 + $0x18] sm:$0xff]
  %v849 = vld [vmem:[#allocation2 + $0x20] sm:$0xff]
  %v850 = vld [vmem:[#allocation2 + $0x28] sm:$0xff]
  %v851 = vld [vmem:[#allocation2 + $0x30] sm:$0xff]
  %v852 = vld [vmem:[#allocation2 + $0x38] sm:$0xff]
  %v853 = vld [vmem:[#allocation2 + $0x40] sm:$0xff]
  %v854 = vld [vmem:[#allocation2 + $0x48] sm:$0xff]
  %v855 = vld [vmem:[#allocation2 + $0x50] sm:$0xff]
  %v856 = vld [vmem:[#allocation2 + $0x58] sm:$0xff]
  %v857 = vld [vmem:[#allocation2 + $0x60] sm:$0xff]
  %v858 = vld [vmem:[#allocation2 + $0x68] sm:$0xff]
  %v859 = vld [vmem:[#allocation2 + $0x70] sm:$0xff]
  %v860 = vld [vmem:[#allocation2 + $0x78] sm:$0xff]
  %v861 = vld [vmem:[%s3] sm:$0xff]
  %v862 = vld [vmem:[%s3 + $0x8] sm:$0xff]
  %v863 = vld [vmem:[%s3 + $0x10] sm:$0xff]
  %v864 = vld [vmem:[%s3 + $0x18] sm:$0xff]
  %v865 = vld [vmem:[%s3 + $0x20] sm:$0xff]
  %v866 = vld [vmem:[%s3 + $0x28] sm:$0xff]
  %v867 = vld [vmem:[%s3 + $0x30] sm:$0xff]
  %v868 = vld [vmem:[%s3 + $0x38] sm:$0xff]
  %v869 = vld [vmem:[%s3 + $0x40] sm:$0xff]
  %v870 = vld [vmem:[%s3 + $0x48] sm:$0xff]
  %v871 = vld [vmem:[%s3 + $0x50] sm:$0xff]
  %v872 = vld [vmem:[%s3 + $0x58] sm:$0xff]
  %v873 = vld [vmem:[%s3 + $0x60] sm:$0xff]
  %v874 = vld [vmem:[%s3 + $0x68] sm:$0xff]
  %v875 = vld [vmem:[%s3 + $0x70] sm:$0xff]
  %v876 = vld [vmem:[%s3 + $0x78] sm:$0xff]
  %877 = vmatpush.msra.mxu0 %v876
  %878 = vmatpush.msra.mxu0 %v875
  %879 = vmatpush.msra.mxu0 %v874
  %880 = vmatpush.msra.mxu0 %v873
  %881 = vmatpush.msra.mxu0 %v872
  %882 = vmatpush.msra.mxu0 %v871
  %883 = vmatpush.msra.mxu0 %v870
  %884 = vmatpush.msra.mxu0 %v869
  %885 = vmatpush.msra.mxu0 %v868
  %886 = vmatpush.msra.mxu0 %v867
  %887 = vmatpush.msra.mxu0 %v866
  %888 = vmatpush.msra.mxu0 %v865
  %889 = vmatpush.msra.mxu0 %v864
  %890 = vmatpush.msra.mxu0 %v863
  %891 = vmatpush.msra.mxu0 %v862
  %892 = vmatpush.msra.mxu0 %v861
  %893 = vmatmul.f32.gmra.mxu0 %v829
  %v894 = vpop.f32.mrf.mxu0
  %v895 = vadd.f32 0.0, %v894
  %896 = vmatmul.f32.gmra.mxu0 %v830
  %v897 = vpop.f32.mrf.mxu0
  %v898 = vadd.f32 0.0, %v897
  %899 = vmatmul.f32.gmra.mxu0 %v831
  %v900 = vpop.f32.mrf.mxu0
  %v901 = vadd.f32 0.0, %v900
  %902 = vmatmul.f32.gmra.mxu0 %v832
  %v903 = vpop.f32.mrf.mxu0
  %v904 = vadd.f32 0.0, %v903
  %905 = vmatmul.f32.gmra.mxu0 %v833
  %v906 = vpop.f32.mrf.mxu0
  %v907 = vadd.f32 0.0, %v906
  %908 = vmatmul.f32.gmra.mxu0 %v834
  %v909 = vpop.f32.mrf.mxu0
  %v910 = vadd.f32 0.0, %v909
  %911 = vmatmul.f32.gmra.mxu0 %v835
  %v912 = vpop.f32.mrf.mxu0
  %v913 = vadd.f32 0.0, %v912
  %914 = vmatmul.f32.gmra.mxu0 %v836
  %v915 = vpop.f32.mrf.mxu0
  %v916 = vadd.f32 0.0, %v915
  %917 = vmatmul.f32.gmra.mxu0 %v837
  %v918 = vpop.f32.mrf.mxu0
  %v919 = vadd.f32 0.0, %v918
  %920 = vmatmul.f32.gmra.mxu0 %v838
  %v921 = vpop.f32.mrf.mxu0
  %v922 = vadd.f32 0.0, %v921
  %923 = vmatmul.f32.gmra.mxu0 %v839
  %v924 = vpop.f32.mrf.mxu0
  %v925 = vadd.f32 0.0, %v924
  %926 = vmatmul.f32.gmra.mxu0 %v840
  %v927 = vpop.f32.mrf.mxu0
  %v928 = vadd.f32 0.0, %v927
  %929 = vmatmul.f32.gmra.mxu0 %v841
  %v930 = vpop.f32.mrf.mxu0
  %v931 = vadd.f32 0.0, %v930
  %932 = vmatmul.f32.gmra.mxu0 %v842
  %v933 = vpop.f32.mrf.mxu0
  %v934 = vadd.f32 0.0, %v933
  %935 = vmatmul.f32.gmra.mxu0 %v843
  %v936 = vpop.f32.mrf.mxu0
  %v937 = vadd.f32 0.0, %v936
  %938 = vmatmul.f32.gmra.mxu0 %v844
  %v939 = vpop.f32.mrf.mxu0
  %v940 = vadd.f32 0.0, %v939
  %941 = vdwg.mxu0
  %v942 = vadd.f32 %v845, %v895
  %v943 = vadd.f32 %v846, %v898
  %v944 = vadd.f32 %v847, %v901
  %v945 = vadd.f32 %v848, %v904
  %v946 = vadd.f32 %v849, %v907
  %v947 = vadd.f32 %v850, %v910
  %v948 = vadd.f32 %v851, %v913
  %v949 = vadd.f32 %v852, %v916
  %v950 = vadd.f32 %v853, %v919
  %v951 = vadd.f32 %v854, %v922
  %v952 = vadd.f32 %v855, %v925
  %v953 = vadd.f32 %v856, %v928
  %v954 = vadd.f32 %v857, %v931
  %v955 = vadd.f32 %v858, %v934
  %v956 = vadd.f32 %v859, %v937
  %v957 = vadd.f32 %v860, %v940
  %958 = vst [vmem:[#allocation2] sm:$0xff] %v942
  %959 = vst [vmem:[#allocation2 + $0x8] sm:$0xff] %v943
  %960 = vst [vmem:[#allocation2 + $0x10] sm:$0xff] %v944
  %961 = vst [vmem:[#allocation2 + $0x18] sm:$0xff] %v945
  %962 = vst [vmem:[#allocation2 + $0x20] sm:$0xff] %v946
  %963 = vst [vmem:[#allocation2 + $0x28] sm:$0xff] %v947
  %964 = vst [vmem:[#allocation2 + $0x30] sm:$0xff] %v948
  %965 = vst [vmem:[#allocation2 + $0x38] sm:$0xff] %v949
  %966 = vst [vmem:[#allocation2 + $0x40] sm:$0xff] %v950
  %967 = vst [vmem:[#allocation2 + $0x48] sm:$0xff] %v951
  %968 = vst [vmem:[#allocation2 + $0x50] sm:$0xff] %v952
  %969 = vst [vmem:[#allocation2 + $0x58] sm:$0xff] %v953
  %970 = vst [vmem:[#allocation2 + $0x60] sm:$0xff] %v954
  %971 = vst [vmem:[#allocation2 + $0x68] sm:$0xff] %v955
  %972 = vst [vmem:[#allocation2 + $0x70] sm:$0xff] %v956
  %973 = vst [vmem:[#allocation2 + $0x78] sm:$0xff] %v957
  // Predicated region
  $region26: #{mlp_pallas.1} parent=0 // pred_check
    %p974 = pneg %p20
  $region27: #{mlp_pallas.1} parent=0 // pred_check_branch
    %976 = sbr.rel (%p974) target = $region29
  $region28: #{mlp_pallas.1} parent=0 // pred_region
    %v977 = vld [vmem:[#allocation2] sm:$0xff]
    %v978 = vld [vmem:[#allocation2 + $0x8] sm:$0xff]
    %v979 = vld [vmem:[#allocation2 + $0x10] sm:$0xff]
    %v980 = vld [vmem:[#allocation2 + $0x18] sm:$0xff]
    %v981 = vld [vmem:[#allocation2 + $0x20] sm:$0xff]
    %v982 = vld [vmem:[#allocation2 + $0x28] sm:$0xff]
    %v983 = vld [vmem:[#allocation2 + $0x30] sm:$0xff]
    %v984 = vld [vmem:[#allocation2 + $0x38] sm:$0xff]
    %v985 = vld [vmem:[#allocation2 + $0x40] sm:$0xff]
    %v986 = vld [vmem:[#allocation2 + $0x48] sm:$0xff]
    %v987 = vld [vmem:[#allocation2 + $0x50] sm:$0xff]
    %v988 = vld [vmem:[#allocation2 + $0x58] sm:$0xff]
    %v989 = vld [vmem:[#allocation2 + $0x60] sm:$0xff]
    %v990 = vld [vmem:[#allocation2 + $0x68] sm:$0xff]
    %v991 = vld [vmem:[#allocation2 + $0x70] sm:$0xff]
    %v992 = vld [vmem:[#allocation2 + $0x78] sm:$0xff]
    %v993 = vld [vmem:[%s4] sm:$0x1]
    %v995 = vperm.slane %v993, 0
    %v997 = vadd.f32 %v977, %v995
    %v998 = vadd.f32 %v978, %v995
    %v999 = vadd.f32 %v979, %v995
    %v1000 = vadd.f32 %v980, %v995
    %v1001 = vadd.f32 %v981, %v995
    %v1002 = vadd.f32 %v982, %v995
    %v1003 = vadd.f32 %v983, %v995
    %v1004 = vadd.f32 %v984, %v995
    %v1005 = vadd.f32 %v985, %v995
    %v1006 = vadd.f32 %v986, %v995
    %v1007 = vadd.f32 %v987, %v995
    %v1008 = vadd.f32 %v988, %v995
    %v1009 = vadd.f32 %v989, %v995
    %v1010 = vadd.f32 %v990, %v995
    %v1011 = vadd.f32 %v991, %v995
    %v1012 = vadd.f32 %v992, %v995
    %1013 = vst [vmem:[%s5] sm:$0xff] %v997
    %1014 = vst [vmem:[%s5 + $0x8] sm:$0xff] %v998
    %1015 = vst [vmem:[%s5 + $0x10] sm:$0xff] %v999
    %1016 = vst [vmem:[%s5 + $0x18] sm:$0xff] %v1000
    %1017 = vst [vmem:[%s5 + $0x20] sm:$0xff] %v1001
    %1018 = vst [vmem:[%s5 + $0x28] sm:$0xff] %v1002
    %1019 = vst [vmem:[%s5 + $0x30] sm:$0xff] %v1003
    %1020 = vst [vmem:[%s5 + $0x38] sm:$0xff] %v1004
    %1021 = vst [vmem:[%s5 + $0x40] sm:$0xff] %v1005
    %1022 = vst [vmem:[%s5 + $0x48] sm:$0xff] %v1006
    %1023 = vst [vmem:[%s5 + $0x50] sm:$0xff] %v1007
    %1024 = vst [vmem:[%s5 + $0x58] sm:$0xff] %v1008
    %1025 = vst [vmem:[%s5 + $0x60] sm:$0xff] %v1009
    %1026 = vst [vmem:[%s5 + $0x68] sm:$0xff] %v1010
    %1027 = vst [vmem:[%s5 + $0x70] sm:$0xff] %v1011
    %1028 = vst [vmem:[%s5 + $0x78] sm:$0xff] %v1012
  $region29: #{mlp_pallas.1} parent=0 // pred_fallthru
    _
  // Predicated region
  $region30: #{mlp_pallas.1} parent=0 // pred_check
    _
  $region31: #{mlp_pallas.1} parent=0 // pred_check_branch
    %1030 = sbr.rel (0) target = $region33
  $region32: #{mlp_pallas.1} parent=0 // pred_region
    _
  $region33: #{mlp_pallas.1} parent=0 // pred_fallthru
    _
  // Predicated region
  $region34: #{mlp_pallas.1} parent=0 // pred_check
    _
  $region35: #{mlp_pallas.1} parent=0 // pred_check_branch
    %1032 = sbr.rel (0) target = $region37
  $region36: #{mlp_pallas.1} parent=0 // pred_region
    _
  $region37: #{mlp_pallas.1} parent=0 // pred_fallthru
    _

</llo_original>
